<compile_context>
chip_gen: v6e
topology: v6e:2x2x1
jax: 0.10.0
libtpu: 0.0.40
codegen_flags: <defaults>
</compile_context>

<pallas_src>
import functools

import jax
import jax.numpy as jnp
from jax import lax
from jax.experimental import pallas as pl
from jax.experimental.pallas import tpu as pltpu

_LANES = 128


def _round_up(a: int, m: int) -> int:
    return (a + m - 1) // m * m


def _cdiv(a: int, m: int) -> int:
    return (a + m - 1) // m


def _sublane_multiple(dtype) -> int:
    # Packed sublane multiple: 8 for 4-byte, 16 for 2-byte, 32 for 1-byte.
    itemsize = jnp.dtype(dtype).itemsize
    return {4: 8, 2: 16, 1: 32}.get(itemsize, 8)


# ---------------------------------------------------------------------------
# Kernels
# ---------------------------------------------------------------------------

def _accumulate(x_ref, acc_max_ref, acc_sum_ref, *, k, block_l, length, masked):
    """Fold one (br, block_l) input tile into (br, 128) accumulators.

    Pure elementwise VPU work over lane-aligned 128-wide chunks; masking of the
    (undefined) tail lanes is only compiled into the last-L-block path.
    """
    n_chunks = block_l // _LANES
    acc_m = acc_max_ref[...]
    acc_s = acc_sum_ref[...]
    for q in range(n_chunks):
        xq = x_ref[:, q * _LANES:(q + 1) * _LANES].astype(jnp.float32)
        if masked:
            col = (k * block_l + q * _LANES
                   + lax.broadcasted_iota(jnp.int32, xq.shape, 1))
            valid = col < length
            acc_m = jnp.maximum(acc_m, jnp.where(valid, xq, -jnp.inf))
            acc_s = acc_s + jnp.where(valid, xq, 0.0)
        else:
            acc_m = jnp.maximum(acc_m, xq)
            acc_s = acc_s + xq
    acc_max_ref[...] = acc_m
    acc_sum_ref[...] = acc_s


def _pool_kernel_multi(x_ref, max_ref, avg_ref, acc_max_ref, acc_sum_ref, *,
                       length: int, block_l: int, has_tail: bool):
    """Tiled-L path: running max / running sum into narrow f32 accumulators.

    x_ref:       (br, block_l) one L chunk of a row block
    max_ref:     (br, 1)       per-row max   (written at last k)
    avg_ref:     (br, 1)       per-row mean  (written at last k)
    acc_*_ref:   (br, 128)     f32 accumulators, persist across k
    """
    k = pl.program_id(1)
    last = pl.num_programs(1) - 1

    @pl.when(k == 0)
    def _init():
        acc_max_ref[...] = jnp.full(acc_max_ref.shape, -jnp.inf, jnp.float32)
        acc_sum_ref[...] = jnp.zeros(acc_sum_ref.shape, jnp.float32)

    if has_tail:
        # Only the last L block can contain undefined (out-of-bounds) lanes;
        # keep the hot per-step path mask-free.
        @pl.when(k != last)
        def _full():
            _accumulate(x_ref, acc_max_ref, acc_sum_ref,
                        k=k, block_l=block_l, length=length, masked=False)

        @pl.when(k == last)
        def _tail():
            _accumulate(x_ref, acc_max_ref, acc_sum_ref,
                        k=k, block_l=block_l, length=length, masked=True)
    else:
        _accumulate(x_ref, acc_max_ref, acc_sum_ref,
                    k=k, block_l=block_l, length=length, masked=False)

    @pl.when(k == last)
    def _finalize():
        # One cross-lane (XLU) reduce per row block: (br,128) -> (br,1).
        mx = jnp.max(acc_max_ref[...], axis=1, keepdims=True)
        av = jnp.sum(acc_sum_ref[...], axis=1, keepdims=True) * (1.0 / length)
        max_ref[...] = mx.astype(max_ref.dtype)
        avg_ref[...] = av.astype(avg_ref.dtype)


def _pool_kernel_single(x_ref, max_ref, avg_ref, *, length: int):
    """Fast path when the whole L fits in one tile: reduce straight from the
    streamed input, no scratch, no init/epilogue bookkeeping."""
    x = x_ref[...].astype(jnp.float32)                       # (br, L)
    max_ref[...] = jnp.max(x, axis=1, keepdims=True).astype(max_ref.dtype)
    avg_ref[...] = (jnp.sum(x, axis=1, keepdims=True)
                    * (1.0 / length)).astype(avg_ref.dtype)


# ---------------------------------------------------------------------------
# Wrapper
# ---------------------------------------------------------------------------

def adaptive_concat_pool1d(x: jax.Array,
                           *,
                           max_block_rows: int = 256,
                           max_block_l: int = 2048) -> jax.Array:
    """x: (N, C, L) -> (N, 2*C, 1); equivalent to AdaptiveConcatPool1d(sz=1).

    max_block_l must be a multiple of 128 (2048 is a safe cross-generation
    default; 4096 works on v6e/v7x's larger scoped VMEM).
    """
    assert max_block_l % _LANES == 0, "max_block_l must be a multiple of 128"
    N, C, L = x.shape
    NR = N * C
    x2 = x.reshape(NR, L)                       # rows fill sublanes, L fills lanes

    # Row (sublane) tile.  When NR is small enough that a single max-size block
    # would cover it, split into (at least) two blocks so the "parallel" row
    # axis can be sharded across v7x's two TensorCores.
    sub = _sublane_multiple(x.dtype)
    if sub < NR <= 2 * max_block_rows:
        br = _round_up(_cdiv(NR, 2), sub)
    else:
        br = min(max_block_rows, _round_up(NR, sub))
    br = _round_up(br, sub)
    nr_blocks = _cdiv(NR, br)

    out_shapes = (jax.ShapeDtypeStruct((NR, 1), x.dtype),   # max
                  jax.ShapeDtypeStruct((NR, 1), x.dtype))   # mean

    if L <= max_block_l:
        # Single L tile: block last dim == full array dim, no masking needed.
        kernel = functools.partial(_pool_kernel_single, length=L)
        mx2, av2 = pl.pallas_call(
            kernel,
            out_shape=out_shapes,
            grid=(nr_blocks,),
            in_specs=[pl.BlockSpec((br, L), lambda i: (i, 0))],
            out_specs=[pl.BlockSpec((br, 1), lambda i: (i, 0)),
                       pl.BlockSpec((br, 1), lambda i: (i, 0))],
            compiler_params=pltpu.CompilerParams(
                dimension_semantics=("parallel",)),
        )(x2)
    else:
        bl = max_block_l                         # multiple of 128
        l_blocks = _cdiv(L, bl)
        has_tail = (L % bl) != 0
        kernel = functools.partial(
            _pool_kernel_multi, length=L, block_l=bl, has_tail=has_tail)
        mx2, av2 = pl.pallas_call(
            kernel,
            out_shape=out_shapes,
            grid=(nr_blocks, l_blocks),          # reduction (L) axis last
            in_specs=[pl.BlockSpec((br, bl), lambda i, k: (i, k))],
            out_specs=[pl.BlockSpec((br, 1), lambda i, k: (i, 0)),
                       pl.BlockSpec((br, 1), lambda i, k: (i, 0))],
            scratch_shapes=[
                pltpu.VMEM((br, _LANES), jnp.float32),   # running max
                pltpu.VMEM((br, _LANES), jnp.float32),   # running sum
            ],
            compiler_params=pltpu.CompilerParams(
                dimension_semantics=("parallel", "arbitrary")),
        )(x2)

    # Reassemble PyTorch layout: max channels first, then avg channels.
    mx = mx2.reshape(N, C)
    av = av2.reshape(N, C)
    return jnp.concatenate([mx, av], axis=1)[:, :, None]    # (N, 2C, 1)


def _reference(x):
    return jnp.concatenate(
        [jnp.max(x, axis=-1, keepdims=True),
         jnp.mean(x, axis=-1, keepdims=True)], axis=1)


if __name__ == "__main__":
    key = jax.random.PRNGKey(0)

    # Small shape consistent with the module's forward: (batch, channels, length).
    N, C, L = 2, 4, 16
    x = jax.random.normal(key, (N, C, L), dtype=jnp.float32)

    out = jax.block_until_ready(adaptive_concat_pool1d(x))
    ref = _reference(x)
    assert out.shape == (N, 2 * C, 1), out.shape
    assert jnp.allclose(out, ref, atol=1e-6, rtol=1e-6), "mismatch vs reference"

    # Second shape exercising the tiled-L path, in-kernel tail masking,
    # multiple row blocks, and the accumulator init/finalize logic.
    key2 = jax.random.PRNGKey(1)
    N2, C2, L2 = 2, 8, 2500
    x2 = jax.random.normal(key2, (N2, C2, L2), dtype=jnp.float32)
    out2 = jax.block_until_ready(adaptive_concat_pool1d(x2))
    ref2 = _reference(x2)
    assert out2.shape == (N2, 2 * C2, 1), out2.shape
    assert jnp.allclose(out2, ref2, atol=1e-5, rtol=1e-5), "mismatch (tiled path)"

    print("KERNEL_OK")
</pallas_src>

<mosaic_0001>
module attributes {stable_mosaic.version = 11 : i64} {
  func.func @_pool_kernel_single(%arg0: i32, %arg1: memref<8x16xf32, #tpu.memory_space<vmem>>, %arg2: memref<8x1xf32, #tpu.memory_space<vmem>>, %arg3: memref<8x1xf32, #tpu.memory_space<vmem>>) attributes {dimension_semantics = [#tpu.dimension_semantics<parallel>], iteration_bounds = array<i64: 1>, scalar_prefetch = 0 : i64, scratch_operands = 0 : i64, tpu.core_type = #tpu.core_type<tc>, window_params = [{transform_indices = @transform_0, window_bounds = array<i64: 8, 16>}, {transform_indices = @transform_1, window_bounds = array<i64: 8, 1>}, {transform_indices = @transform_2, window_bounds = array<i64: 8, 1>}]} {
    %c0 = arith.constant 0 : index
    %c0_0 = arith.constant 0 : index
    %0 = vector.load %arg1[%c0, %c0_0] : memref<8x16xf32, #tpu.memory_space<vmem>>, vector<8x16xf32>
    %cst = arith.constant dense<0xFF800000> : vector<8xf32>
    %1 = vector.multi_reduction <maximumf>, %0, %cst [1] : vector<8x16xf32> to vector<8xf32>
    %2 = vector.shape_cast %1 : vector<8xf32> to vector<8x1xf32>
    %c0_1 = arith.constant 0 : index
    %c0_2 = arith.constant 0 : index
    %3 = vector.load %arg2[%c0_1, %c0_2] : memref<8x1xf32, #tpu.memory_space<vmem>>, vector<8x1xf32>
    tpu.vector_store %arg2[%c0_1, %c0_2], %2 {strides = array<i32>} : memref<8x1xf32, #tpu.memory_space<vmem>>, vector<8x1xf32>,
    %cst_3 = arith.constant dense<0.000000e+00> : vector<8xf32>
    %4 = vector.multi_reduction <add>, %0, %cst_3 [1] : vector<8x16xf32> to vector<8xf32>
    %5 = vector.shape_cast %4 : vector<8xf32> to vector<8x1xf32>
    %cst_4 = arith.constant 6.250000e-02 : f32
    %6 = vector.broadcast %cst_4 : f32 to vector<8x1xf32>
    %7 = arith.mulf %5, %6 : vector<8x1xf32>
    %c0_5 = arith.constant 0 : index
    %c0_6 = arith.constant 0 : index
    %8 = vector.load %arg3[%c0_5, %c0_6] : memref<8x1xf32, #tpu.memory_space<vmem>>, vector<8x1xf32>
    tpu.vector_store %arg3[%c0_5, %c0_6], %7 {strides = array<i32>} : memref<8x1xf32, #tpu.memory_space<vmem>>, vector<8x1xf32>,
    return
  }
  func.func @transform_0(%arg0: i32) -> (i32, i32) {
    %c0_i32 = arith.constant 0 : i32
    %c0_i32_0 = arith.constant 0 : i32
    return %arg0, %c0_i32 : i32, i32
  }
  func.func @transform_1(%arg0: i32) -> (i32, i32) {
    %c0_i32 = arith.constant 0 : i32
    %c0_i32_0 = arith.constant 0 : i32
    return %arg0, %c0_i32 : i32, i32
  }
  func.func @transform_2(%arg0: i32) -> (i32, i32) {
    %c0_i32 = arith.constant 0 : i32
    %c0_i32_0 = arith.constant 0 : i32
    return %arg0, %c0_i32 : i32, i32
  }
}

</mosaic_0001>

<llo_original>
// kernel: tpu_custom_call.1
$region0: #{tpu_custom_call.1}
  #allocation0 [shape = 'u32[]', space=smem, size = 0x4, offset = 0x4, fixed_abs, tag = 'smem constant byte address 0x4 - core index']
  #allocation1 [shape = 'u32[144,128]{1,0:T(1,128)}', space=vmem, size = 0x12000, scoped, tag = 'internal scratch']
  %s0 = inlined_call_operand.hbm [shape: f32[8,16], index: 0, kind: input, shape index: {}]
  %s1 = inlined_call_operand.vmem [shape: f32[8,1], index: 1, kind: output, shape index: {0}]
  %s2 = inlined_call_operand.vmem [shape: f32[8,1], index: 2, kind: output, shape index: {1}]
  %3 = xla_tuple %s1, %s2
  %s4 = sld [smem:[#allocation0]]
  $region26: #{tpu_custom_call.1} parent=0
    _
  %s6 = ssub.s32 1, %s4
  %s7 = scalar_select 0, %s6, %s4
  $region1: #{tpu_custom_call.1} parent=0
    #allocation2 [shape = 'u8[4096]{0}', space=vmem, size = 0x1000, scoped, tag = 'input window, operand 0, single buffered']
    #allocation3 [shape = 's32[1]{0}', space=sflag, size = 0x4, scoped, tag = 'scoped memory for tpu_custom_call.1']
    %8 = vsyncpa [#allocation3], 0
    // Predicated region
    $region2: #{tpu_custom_call.1} parent=1 // pred_check
      _
    $region3: #{tpu_custom_call.1} parent=1 // pred_check_branch
      %10 = sbr.rel (0) target = $region5
    $region4: #{tpu_custom_call.1} parent=1 // pred_region
      %s12 = ssub.s32 128, 128
      %13 = vsyncadd [#allocation3], %s12
      %s15 = sshll.u32 [#allocation2], 4
      %s16 = int_to_ptr.vmem [resolvable:$true] %s15
      %18 = dma.hbm_to_vmem [thread:$0]  %s0, 128, %s16, [#allocation3]
    $region5: #{tpu_custom_call.1} parent=1 // pred_fallthru
      _
    // Predicated region
    $region6: #{tpu_custom_call.1} parent=1 // pred_check
      _
    $region7: #{tpu_custom_call.1} parent=1 // pred_check_branch
      %20 = sbr.rel (0) target = $region9
    $region8: #{tpu_custom_call.1} parent=1 // pred_region
      %21 = dma.done [#allocation3], 128
    $region9: #{tpu_custom_call.1} parent=1 // pred_fallthru
      _
    %v22 = vld [vmem:[#allocation2] sm:$0xff]
    %vm23 = vcmask 130048
    %v24 = vsel %vm23, %v22, -inf
    %25 = vmax.xlane.f32.xlu0 %v24
    %v26 = vpop.xlane.xlu0 %25
    %vm27 = vcmask 7168
    %28 = vst.msk [vmem:[%s1] sm:$0xff] %vm27, %v26
    %v29 = vsel %vm23, %v22, 0.0
    %30 = vadd.xlane.f32.xlu0 %v29
    %v31 = vpop.xlane.xlu0 %30
    %v32 = vmul.f32 %v31, 0.0625
    %33 = vst.msk [vmem:[%s2] sm:$0xff] %vm27, %v32
    // Predicated region
    $region10: #{tpu_custom_call.1} parent=1 // pred_check
      _
    $region11: #{tpu_custom_call.1} parent=1 // pred_check_branch
      %35 = sbr.rel (0) target = $region13
    $region12: #{tpu_custom_call.1} parent=1 // pred_region
      _
    $region13: #{tpu_custom_call.1} parent=1 // pred_fallthru
      _
    // Predicated region
    $region14: #{tpu_custom_call.1} parent=1 // pred_check
      _
    $region15: #{tpu_custom_call.1} parent=1 // pred_check_branch
      %37 = sbr.rel (0) target = $region17
    $region16: #{tpu_custom_call.1} parent=1 // pred_region
      _
    $region17: #{tpu_custom_call.1} parent=1 // pred_fallthru
      _
    // Predicated region
    $region18: #{tpu_custom_call.1} parent=1 // pred_check
      _
    $region19: #{tpu_custom_call.1} parent=1 // pred_check_branch
      %39 = sbr.rel (0) target = $region21
    $region20: #{tpu_custom_call.1} parent=1 // pred_region
      _
    $region21: #{tpu_custom_call.1} parent=1 // pred_fallthru
      _
    // Predicated region
    $region22: #{tpu_custom_call.1} parent=1 // pred_check
      _
    $region23: #{tpu_custom_call.1} parent=1 // pred_check_branch
      %41 = sbr.rel (0) target = $region25
    $region24: #{tpu_custom_call.1} parent=1 // pred_region
      _
    $region25: #{tpu_custom_call.1} parent=1 // pred_fallthru
      _
    %42 = vsyncpa [#allocation3], 1

</llo_original>
